<compile_context>
chip_gen: v5e
topology: v5e:2x2
jax: 0.10.0
libtpu: 0.0.40
codegen_flags: <defaults>
</compile_context>

<pallas_src>
import jax
import jax.numpy as jnp
from jax.experimental import pallas as pl
from jax.experimental.pallas import tpu as pltpu


def _class_head_kernel(x_ref, w0_ref, w1_ref, b0_ref, b1_ref, o0_ref, o1_ref):
    # x_ref : (1, Cin, T)   activation tile in native channels-first layout
    # w*_ref: (A, Cin)      class-0 / class-1 rows of the 1x1 conv weight
    # b*_ref: (A, 1)        matching bias columns
    # o*_ref: (1, A, T)     log-probability of class 0 / class 1 per anchor
    x = x_ref[0]                                                       # (Cin, T)
    y0 = jnp.dot(w0_ref[...], x, preferred_element_type=jnp.float32) + b0_ref[...]
    y1 = jnp.dot(w1_ref[...], x, preferred_element_type=jnp.float32) + b1_ref[...]
    # Numerically stable 2-way log-softmax; all ops are full-vreg VPU/EUP work.
    m = jnp.maximum(y0, y1)
    lse = m + jnp.log(jnp.exp(y0 - m) + jnp.exp(y1 - m))
    o0_ref[0] = (y0 - lse).astype(o0_ref.dtype)
    o1_ref[0] = (y1 - lse).astype(o1_ref.dtype)


def class_head_forward(x_nchw, weight, bias, *, num_anchors=3, tile_hw=2048):
    """x_nchw: (B, Cin, H, W); weight: (Cout, Cin, 1, 1); bias: (Cout,)."""
    b, cin, h, w = x_nchw.shape
    cout = weight.shape[0]
    assert cout == num_anchors * 2
    hw = h * w

    # Free reshape (no data movement): keep the input channels-first.
    x3 = x_nchw.reshape(b, cin, hw)

    # Lane-dense HW tile: the full H*W extent or a multiple of 128 (no input pad;
    # Pallas clips the ragged last block's writes, its garbage lanes are unused).
    if hw <= tile_hw:
        tile_hw = hw
    else:
        tile_hw = max(128, (tile_hw // 128) * 128)
    grid = (b, pl.cdiv(hw, tile_hw))

    # Split the 1x1-conv weight/bias into class-0 and class-1 rows per anchor
    # (channel layout is [a0c0, a0c1, a1c0, a1c1, ...] == view(..., A, 2)).
    w_full = weight.reshape(cout, cin).astype(jnp.float32)
    w0 = w_full[0::2]                                   # (A, Cin)
    w1 = w_full[1::2]                                   # (A, Cin)
    b0 = bias[0::2].astype(jnp.float32).reshape(num_anchors, 1)
    b1 = bias[1::2].astype(jnp.float32).reshape(num_anchors, 1)

    cost = pl.CostEstimate(
        flops=2 * b * hw * cin * cout,
        transcendentals=3 * b * hw * num_anchors,
        bytes_accessed=4 * (b * cin * hw + 2 * b * num_anchors * hw + cout * (cin + 1)),
    )

    o0, o1 = pl.pallas_call(
        _class_head_kernel,
        out_shape=(
            jax.ShapeDtypeStruct((b, num_anchors, hw), jnp.float32),
            jax.ShapeDtypeStruct((b, num_anchors, hw), jnp.float32),
        ),
        grid_spec=pltpu.PrefetchScalarGridSpec(
            num_scalar_prefetch=0,
            grid=grid,
            in_specs=[
                pl.BlockSpec((1, cin, tile_hw), lambda bi, j: (bi, 0, j)),
                pl.BlockSpec((num_anchors, cin), lambda bi, j: (0, 0)),
                pl.BlockSpec((num_anchors, cin), lambda bi, j: (0, 0)),
                pl.BlockSpec((num_anchors, 1), lambda bi, j: (0, 0)),
                pl.BlockSpec((num_anchors, 1), lambda bi, j: (0, 0)),
            ],
            out_specs=[
                pl.BlockSpec((1, num_anchors, tile_hw), lambda bi, j: (bi, 0, j)),
                pl.BlockSpec((1, num_anchors, tile_hw), lambda bi, j: (bi, 0, j)),
            ],
        ),
        compiler_params=pltpu.CompilerParams(
            dimension_semantics=("parallel", "parallel"),
        ),
        cost_estimate=cost,
    )(x3, w0, w1, b0, b1)

    # Tiny output-side relayout (only Cout=2A floats/pixel): (B,A,HW)x2 -> (B,HW*A,2)
    out = jnp.stack([o0, o1], axis=-1)          # (B, A, HW, 2)
    out = jnp.transpose(out, (0, 2, 1, 3))      # (B, HW, A, 2)
    return out.reshape(b, hw * num_anchors, 2)


if __name__ == "__main__":
    key = jax.random.PRNGKey(0)
    k_x, k_w, k_b = jax.random.split(key, 3)

    B, Cin, H, W = 2, 64, 16, 16
    num_anchors = 3
    Cout = num_anchors * 2

    x = jax.random.normal(k_x, (B, Cin, H, W), dtype=jnp.float32)
    # PyTorch-shaped params: weight (Cout, Cin, 1, 1), bias (Cout,)
    weight = jax.random.normal(k_w, (Cout, Cin, 1, 1), dtype=jnp.float32) * 0.05
    bias = jax.random.normal(k_b, (Cout,), dtype=jnp.float32) * 0.05

    out = class_head_forward(x, weight, bias, num_anchors=num_anchors)
    out = jax.block_until_ready(out)

    # Reference in plain JAX (1x1 conv == matmul), verifies semantics/layout.
    w_mat = jnp.transpose(weight.reshape(Cout, Cin), (1, 0))
    ref = jnp.transpose(x, (0, 2, 3, 1)) @ w_mat + bias            # (B,H,W,Cout)
    ref = ref.reshape(B, H, W, num_anchors, 2)
    ref = jax.nn.log_softmax(ref, axis=-1).reshape(B, -1, 2)

    assert out.shape == (B, H * W * num_anchors, 2)
    assert jnp.allclose(out, ref, atol=1e-4, rtol=1e-4)

    print("KERNEL_OK")
</pallas_src>

<mosaic_0001>
module attributes {stable_mosaic.version = 11 : i64} {
  func.func @_class_head_kernel(%arg0: i32, %arg1: i32, %arg2: memref<1x64x256xf32, #tpu.memory_space<vmem>>, %arg3: memref<3x64xf32, #tpu.memory_space<vmem>>, %arg4: memref<3x64xf32, #tpu.memory_space<vmem>>, %arg5: memref<3x1xf32, #tpu.memory_space<vmem>>, %arg6: memref<3x1xf32, #tpu.memory_space<vmem>>, %arg7: memref<1x3x256xf32, #tpu.memory_space<vmem>>, %arg8: memref<1x3x256xf32, #tpu.memory_space<vmem>>) attributes {dimension_semantics = [#tpu.dimension_semantics<parallel>, #tpu.dimension_semantics<parallel>], iteration_bounds = array<i64: 2, 1>, scalar_prefetch = 0 : i64, scratch_operands = 0 : i64, tpu.core_type = #tpu.core_type<tc>, window_params = [{transform_indices = @transform_0, window_bounds = array<i64: 1, 64, 256>}, {pipeline_mode = #tpu.pipeline_mode<synchronous>, transform_indices = @transform_1, window_bounds = array<i64: 3, 64>}, {pipeline_mode = #tpu.pipeline_mode<synchronous>, transform_indices = @transform_2, window_bounds = array<i64: 3, 64>}, {pipeline_mode = #tpu.pipeline_mode<synchronous>, transform_indices = @transform_3, window_bounds = array<i64: 3, 1>}, {pipeline_mode = #tpu.pipeline_mode<synchronous>, transform_indices = @transform_4, window_bounds = array<i64: 3, 1>}, {transform_indices = @transform_5, window_bounds = array<i64: 1, 3, 256>}, {transform_indices = @transform_6, window_bounds = array<i64: 1, 3, 256>}]} {
    %c0 = arith.constant 0 : index
    %c0_0 = arith.constant 0 : index
    %c0_1 = arith.constant 0 : index
    %0 = vector.load %arg2[%c0, %c0_0, %c0_1] : memref<1x64x256xf32, #tpu.memory_space<vmem>>, vector<1x64x256xf32>
    %1 = vector.shape_cast %0 : vector<1x64x256xf32> to vector<64x256xf32>
    %c0_2 = arith.constant 0 : index
    %c0_3 = arith.constant 0 : index
    %2 = vector.load %arg3[%c0_2, %c0_3] : memref<3x64xf32, #tpu.memory_space<vmem>>, vector<3x64xf32>
    %cst = arith.constant dense<0.000000e+00> : vector<3x256xf32>
    %3 = tpu.matmul %2, %1, %cst {dimension_numbers = #tpu.dot_dimension_numbers<[1], [0], [0], [1], [0, 0, 1, 1], [], []>} : vector<3x64xf32>, vector<64x256xf32>, vector<3x256xf32> -> vector<3x256xf32>
    %c0_4 = arith.constant 0 : index
    %c0_5 = arith.constant 0 : index
    %4 = vector.load %arg5[%c0_4, %c0_5] : memref<3x1xf32, #tpu.memory_space<vmem>>, vector<3x1xf32>
    %5 = vector.broadcast %4 : vector<3x1xf32> to vector<3x256xf32>
    %6 = arith.addf %3, %5 : vector<3x256xf32>
    %c0_6 = arith.constant 0 : index
    %c0_7 = arith.constant 0 : index
    %7 = vector.load %arg4[%c0_6, %c0_7] : memref<3x64xf32, #tpu.memory_space<vmem>>, vector<3x64xf32>
    %cst_8 = arith.constant dense<0.000000e+00> : vector<3x256xf32>
    %8 = tpu.matmul %7, %1, %cst_8 {dimension_numbers = #tpu.dot_dimension_numbers<[1], [0], [0], [1], [0, 0, 1, 1], [], []>} : vector<3x64xf32>, vector<64x256xf32>, vector<3x256xf32> -> vector<3x256xf32>
    %c0_9 = arith.constant 0 : index
    %c0_10 = arith.constant 0 : index
    %9 = vector.load %arg6[%c0_9, %c0_10] : memref<3x1xf32, #tpu.memory_space<vmem>>, vector<3x1xf32>
    %10 = vector.broadcast %9 : vector<3x1xf32> to vector<3x256xf32>
    %11 = arith.addf %8, %10 : vector<3x256xf32>
    %12 = arith.maximumf %6, %11 : vector<3x256xf32>
    %13 = arith.subf %6, %12 : vector<3x256xf32>
    %14 = math.exp %13 : vector<3x256xf32>
    %15 = arith.subf %11, %12 : vector<3x256xf32>
    %16 = math.exp %15 : vector<3x256xf32>
    %17 = arith.addf %14, %16 : vector<3x256xf32>
    %18 = math.log %17 : vector<3x256xf32>
    %19 = arith.addf %12, %18 : vector<3x256xf32>
    %20 = arith.subf %6, %19 : vector<3x256xf32>
    %c0_11 = arith.constant 0 : index
    %c0_12 = arith.constant 0 : index
    %c0_13 = arith.constant 0 : index
    %21 = vector.load %arg7[%c0_11, %c0_12, %c0_13] : memref<1x3x256xf32, #tpu.memory_space<vmem>>, vector<1x3x256xf32>
    %22 = vector.shape_cast %21 : vector<1x3x256xf32> to vector<3x256xf32>
    %23 = vector.shape_cast %20 : vector<3x256xf32> to vector<1x3x256xf32>
    tpu.vector_store %arg7[%c0_11, %c0_12, %c0_13], %23 {strides = array<i32>} : memref<1x3x256xf32, #tpu.memory_space<vmem>>, vector<1x3x256xf32>,
    %24 = arith.subf %11, %19 : vector<3x256xf32>
    %c0_14 = arith.constant 0 : index
    %c0_15 = arith.constant 0 : index
    %c0_16 = arith.constant 0 : index
    %25 = vector.load %arg8[%c0_14, %c0_15, %c0_16] : memref<1x3x256xf32, #tpu.memory_space<vmem>>, vector<1x3x256xf32>
    %26 = vector.shape_cast %25 : vector<1x3x256xf32> to vector<3x256xf32>
    %27 = vector.shape_cast %24 : vector<3x256xf32> to vector<1x3x256xf32>
    tpu.vector_store %arg8[%c0_14, %c0_15, %c0_16], %27 {strides = array<i32>} : memref<1x3x256xf32, #tpu.memory_space<vmem>>, vector<1x3x256xf32>,
    return
  }
  func.func @transform_0(%arg0: i32, %arg1: i32) -> (i32, i32, i32) {
    %c0_i32 = arith.constant 0 : i32
    %c0_i32_0 = arith.constant 0 : i32
    return %arg0, %c0_i32, %arg1 : i32, i32, i32
  }
  func.func @transform_1(%arg0: i32, %arg1: i32) -> (i32, i32) {
    %c0_i32 = arith.constant 0 : i32
    %c0_i32_0 = arith.constant 0 : i32
    %c0_i32_1 = arith.constant 0 : i32
    return %c0_i32, %c0_i32_0 : i32, i32
  }
  func.func @transform_2(%arg0: i32, %arg1: i32) -> (i32, i32) {
    %c0_i32 = arith.constant 0 : i32
    %c0_i32_0 = arith.constant 0 : i32
    %c0_i32_1 = arith.constant 0 : i32
    return %c0_i32, %c0_i32_0 : i32, i32
  }
  func.func @transform_3(%arg0: i32, %arg1: i32) -> (i32, i32) {
    %c0_i32 = arith.constant 0 : i32
    %c0_i32_0 = arith.constant 0 : i32
    %c0_i32_1 = arith.constant 0 : i32
    return %c0_i32, %c0_i32_0 : i32, i32
  }
  func.func @transform_4(%arg0: i32, %arg1: i32) -> (i32, i32) {
    %c0_i32 = arith.constant 0 : i32
    %c0_i32_0 = arith.constant 0 : i32
    %c0_i32_1 = arith.constant 0 : i32
    return %c0_i32, %c0_i32_0 : i32, i32
  }
  func.func @transform_5(%arg0: i32, %arg1: i32) -> (i32, i32, i32) {
    %c0_i32 = arith.constant 0 : i32
    %c0_i32_0 = arith.constant 0 : i32
    return %arg0, %c0_i32, %arg1 : i32, i32, i32
  }
  func.func @transform_6(%arg0: i32, %arg1: i32) -> (i32, i32, i32) {
    %c0_i32 = arith.constant 0 : i32
    %c0_i32_0 = arith.constant 0 : i32
    return %arg0, %c0_i32, %arg1 : i32, i32, i32
  }
}

</mosaic_0001>

<llo_original>
// kernel: tpu_custom_call.1
$region0: #{tpu_custom_call.1}
  #allocation0 [shape = 'u32[]', space=smem, size = 0x4, offset = 0x4, fixed_abs, tag = 'smem constant byte address 0x4 - core index']
  #allocation1 [shape = 'u32[72,128]{1,0:T(1,128)}', space=vmem, size = 0x9000, scoped, tag = 'internal scratch']
  %s0 = inlined_call_operand.hbm [shape: f32[2,64,256], index: 0, kind: input, shape index: {}]
  %s1 = inlined_call_operand.vmem [shape: f32[3,64], index: 1, kind: input, shape index: {}]
  %s2 = inlined_call_operand.vmem [shape: f32[3,64], index: 2, kind: input, shape index: {}]
  %s3 = inlined_call_operand.vmem [shape: f32[3,1], index: 3, kind: input, shape index: {}]
  %s4 = inlined_call_operand.vmem [shape: f32[3,1], index: 4, kind: input, shape index: {}]
  %s5 = inlined_call_operand.vmem [shape: f32[2,3,256], index: 5, kind: output, shape index: {0}]
  %s6 = inlined_call_operand.vmem [shape: f32[2,3,256], index: 6, kind: output, shape index: {1}]
  %7 = xla_tuple %s5, %s6
  %s8 = sld [smem:[#allocation0]]
  $region65: #{tpu_custom_call.1} parent=0
    _
  %s10 = ssub.s32 1, %s8
  %s11 = scalar_select 0, %s10, %s8
  $region1: #{tpu_custom_call.1} parent=0
    #allocation2 [shape = 'u8[131072]{0}', space=vmem, size = 0x20000, scoped, tag = 'input window, operand 0']
    #allocation3 [shape = 's32[2]{0}', space=sflag, size = 0x8, scoped, tag = 'scoped memory for tpu_custom_call.1']
    %12 = vsyncpa [#allocation3], 0
    %s13 = scalar_lea.sflag [#allocation3], 1
    %14 = vsyncpa %s13, 0
    loop: start=0, step=1, limit=4
    $region2: #{tpu_custom_call.1} parent=1 // loop_pre_header
      _
    $region3: #{tpu_custom_call.1} parent=1 // loop_header
      %s16 = sphi 0, %s20
      %p17 = scmp.ge.s32.totalorder %s16, 4
      %s23 = sphi 0, %s35
      %s24 = sphi 0, %s31
      %s25 = sphi 0, %s23
      %s26 = sphi 0, %s24
      %s27 = sphi 0, %s25
      %s28 = sphi 0, %s26
      %s40 = sphi 0, %s42
      %s43 = sphi 0, %s40
      %s44 = sphi 0, %s43
      %s60 = sphi 0, %s44
      %s64 = sphi 0, %s64
      %s66 = sphi 0, %s64
      %s67 = sphi 0, %s66
      %s81 = sphi 0, %s67
      %s85 = sphi 0, %s85
      %s87 = sphi 0, %s85
      %s88 = sphi 0, %s87
      %s102 = sphi 0, %s88
      %s106 = sphi 0, %s106
      %s108 = sphi 0, %s106
      %s109 = sphi 0, %s108
      %s123 = sphi 0, %s109
      %s127 = sphi 0, %s127
      %s129 = sphi 0, %s127
      %s130 = sphi 0, %s129
      %s144 = sphi 0, %s130
      %s152 = sphi 0, %s154
      %s155 = sphi 0, %s152
      %s156 = sphi 0, %s155
      %s172 = sphi 0, %s156
      %s180 = sphi 0, %s182
      %s183 = sphi 0, %s180
      %s184 = sphi 0, %s183
      %s200 = sphi 0, %s184
    $region4: #{tpu_custom_call.1} parent=1 // loop_header_branch
      %19 = sbr.rel (%p17) target = $region8
    $region5: #{tpu_custom_call.1} parent=1 // loop_body
      %s21 = ssub.s32 %s16, 1
      %s22 = ssub.s32 %s16, 2
      %s29 = sadd.s32 1, %s24
      %p30 = scmp.ge.s32.totalorder %s29, 1
      %s31 = scalar_select %p30, 0, %s29
      %s32 = sadd.s32 1, %s23
      %s33 = scalar_select %p30, %s32, %s23
      %p34 = scmp.ge.s32.totalorder %s33, 2
      %s35 = scalar_select %p34, 0, %s33
      %s36 = ssub.s32 %s23, %s35
      %s37 = ssub.s32 %s24, %s31
      %s38 = sor.u32 %s36, %s37
      %p39 = scmp.eq.s32.totalorder %s38, 0
      %s41 = sadd.s32 %s40, 1
      %s42 = scalar_select %p39, %s40, %s41
      %p45 = pneg %p39
      %p46 = scmp.eq.s32.totalorder %s16, 1
      %p47 = por %p45, %p46
      %p48 = scmp.ne.s32.totalorder %s40, %s43
      %p49 = scmp.eq.s32.totalorder %s16, 0
      %p50 = por %p48, %p49
      %p51 = scmp.ne.s32.totalorder %s40, %s43
      %p52 = scmp.eq.s32.totalorder %s21, 1
      %p53 = por %p51, %p52
      %p54 = scmp.ne.s32.totalorder %s43, %s44
      %p55 = scmp.eq.s32.totalorder %s21, 0
      %p56 = por %p54, %p55
      %p57 = scmp.ne.s32.totalorder %s43, %s44
      %p58 = scmp.eq.s32.totalorder %s22, 1
      %p59 = por %p57, %p58
      %p61 = scmp.ne.s32.totalorder %s44, %s60
      %p62 = scmp.eq.s32.totalorder %s22, 0
      %p63 = por %p61, %p62
      %s65 = sadd.s32 %s64, 1
      %p68 = scmp.eq.s32.totalorder %s16, 1
      %p69 = scmp.ne.s32.totalorder %s64, %s66
      %p70 = scmp.eq.s32.totalorder %s16, 0
      %p71 = por %p69, %p70
      %p72 = scmp.ne.s32.totalorder %s64, %s66
      %p73 = scmp.eq.s32.totalorder %s21, 1
      %p74 = por %p72, %p73
      %p75 = scmp.ne.s32.totalorder %s66, %s67
      %p76 = scmp.eq.s32.totalorder %s21, 0
      %p77 = por %p75, %p76
      %p78 = scmp.ne.s32.totalorder %s66, %s67
      %p79 = scmp.eq.s32.totalorder %s22, 1
      %p80 = por %p78, %p79
      %p82 = scmp.ne.s32.totalorder %s67, %s81
      %p83 = scmp.eq.s32.totalorder %s22, 0
      %p84 = por %p82, %p83
      %s86 = sadd.s32 %s85, 1
      %p89 = scmp.eq.s32.totalorder %s16, 1
      %p90 = scmp.ne.s32.totalorder %s85, %s87
      %p91 = scmp.eq.s32.totalorder %s16, 0
      %p92 = por %p90, %p91
      %p93 = scmp.ne.s32.totalorder %s85, %s87
      %p94 = scmp.eq.s32.totalorder %s21, 1
      %p95 = por %p93, %p94
      %p96 = scmp.ne.s32.totalorder %s87, %s88
      %p97 = scmp.eq.s32.totalorder %s21, 0
      %p98 = por %p96, %p97
      %p99 = scmp.ne.s32.totalorder %s87, %s88
      %p100 = scmp.eq.s32.totalorder %s22, 1
      %p101 = por %p99, %p100
      %p103 = scmp.ne.s32.totalorder %s88, %s102
      %p104 = scmp.eq.s32.totalorder %s22, 0
      %p105 = por %p103, %p104
      %s107 = sadd.s32 %s106, 1
      %p110 = scmp.eq.s32.totalorder %s16, 1
      %p111 = scmp.ne.s32.totalorder %s106, %s108
      %p112 = scmp.eq.s32.totalorder %s16, 0
      %p113 = por %p111, %p112
      %p114 = scmp.ne.s32.totalorder %s106, %s108
      %p115 = scmp.eq.s32.totalorder %s21, 1
      %p116 = por %p114, %p115
      %p117 = scmp.ne.s32.totalorder %s108, %s109
      %p118 = scmp.eq.s32.totalorder %s21, 0
      %p119 = por %p117, %p118
      %p120 = scmp.ne.s32.totalorder %s108, %s109
      %p121 = scmp.eq.s32.totalorder %s22, 1
      %p122 = por %p120, %p121
      %p124 = scmp.ne.s32.totalorder %s109, %s123
      %p125 = scmp.eq.s32.totalorder %s22, 0
      %p126 = por %p124, %p125
      %s128 = sadd.s32 %s127, 1
      %p131 = scmp.eq.s32.totalorder %s16, 1
      %p132 = scmp.ne.s32.totalorder %s127, %s129
      %p133 = scmp.eq.s32.totalorder %s16, 0
      %p134 = por %p132, %p133
      %p135 = scmp.ne.s32.totalorder %s127, %s129
      %p136 = scmp.eq.s32.totalorder %s21, 1
      %p137 = por %p135, %p136
      %p138 = scmp.ne.s32.totalorder %s129, %s130
      %p139 = scmp.eq.s32.totalorder %s21, 0
      %p140 = por %p138, %p139
      %p141 = scmp.ne.s32.totalorder %s129, %s130
      %p142 = scmp.eq.s32.totalorder %s22, 1
      %p143 = por %p141, %p142
      %p145 = scmp.ne.s32.totalorder %s130, %s144
      %p146 = scmp.eq.s32.totalorder %s22, 0
      %p147 = por %p145, %p146
      %s148 = ssub.s32 %s23, %s35
      %s149 = ssub.s32 %s24, %s31
      %s150 = sor.u32 %s148, %s149
      %p151 = scmp.eq.s32.totalorder %s150, 0
      %s153 = sadd.s32 %s152, 1
      %s154 = scalar_select %p151, %s152, %s153
      %p157 = pneg %p151
      %p158 = scmp.eq.s32.totalorder %s16, 1
      %p159 = por %p157, %p158
      %p160 = scmp.ne.s32.totalorder %s152, %s155
      %p161 = scmp.eq.s32.totalorder %s16, 0
      %p162 = por %p160, %p161
      %p163 = scmp.ne.s32.totalorder %s152, %s155
      %p164 = scmp.eq.s32.totalorder %s21, 1
      %p165 = por %p163, %p164
      %p166 = scmp.ne.s32.totalorder %s155, %s156
      %p167 = scmp.eq.s32.totalorder %s21, 0
      %p168 = por %p166, %p167
      %p169 = scmp.ne.s32.totalorder %s155, %s156
      %p170 = scmp.eq.s32.totalorder %s22, 1
      %p171 = por %p169, %p170
      %p173 = scmp.ne.s32.totalorder %s156, %s172
      %p174 = scmp.eq.s32.totalorder %s22, 0
      %p175 = por %p173, %p174
      %s176 = ssub.s32 %s23, %s35
      %s177 = ssub.s32 %s24, %s31
      %s178 = sor.u32 %s176, %s177
      %p179 = scmp.eq.s32.totalorder %s178, 0
      %s181 = sadd.s32 %s180, 1
      %s182 = scalar_select %p179, %s180, %s181
      %p185 = pneg %p179
      %p186 = scmp.eq.s32.totalorder %s16, 1
      %p187 = por %p185, %p186
      %p188 = scmp.ne.s32.totalorder %s180, %s183
      %p189 = scmp.eq.s32.totalorder %s16, 0
      %p190 = por %p188, %p189
      %p191 = scmp.ne.s32.totalorder %s180, %s183
      %p192 = scmp.eq.s32.totalorder %s21, 1
      %p193 = por %p191, %p192
      %p194 = scmp.ne.s32.totalorder %s183, %s184
      %p195 = scmp.eq.s32.totalorder %s21, 0
      %p196 = por %p194, %p195
      %p197 = scmp.ne.s32.totalorder %s183, %s184
      %p198 = scmp.eq.s32.totalorder %s22, 1
      %p199 = por %p197, %p198
      %p201 = scmp.ne.s32.totalorder %s184, %s200
      %p202 = scmp.eq.s32.totalorder %s22, 0
      %p203 = por %p201, %p202
      %p204 = scmp.le.s32.totalorder 1, %s16
      %p205 = scmp.lt.s32.totalorder %s16, 3
      %p206 = pnand %p204, %p205
      %p207 = pneg %p206
      // Predicated region
      $region9: #{tpu_custom_call.1} parent=5 // pred_check
        _
      $region10: #{tpu_custom_call.1} parent=5 // pred_check_branch
        %209 = sbr.rel (%p206) target = $region12
      $region11: #{tpu_custom_call.1} parent=5 // pred_region
        %s210 = ssub.s32 %s16, 1
        // Predicated region
        $region13: #{tpu_custom_call.1} parent=11 // pred_check
          %p211 = pneg %p77
        $region14: #{tpu_custom_call.1} parent=11 // pred_check_branch
          %213 = sbr.rel (%p211) target = $region16
        $region15: #{tpu_custom_call.1} parent=11 // pred_region
          _
        $region16: #{tpu_custom_call.1} parent=11 // pred_fallthru
          _
        // Predicated region
        $region17: #{tpu_custom_call.1} parent=11 // pred_check
          %p214 = pneg %p98
        $region18: #{tpu_custom_call.1} parent=11 // pred_check_branch
          %216 = sbr.rel (%p214) target = $region20
        $region19: #{tpu_custom_call.1} parent=11 // pred_region
          _
        $region20: #{tpu_custom_call.1} parent=11 // pred_fallthru
          _
        // Predicated region
        $region21: #{tpu_custom_call.1} parent=11 // pred_check
          %p217 = pneg %p119
        $region22: #{tpu_custom_call.1} parent=11 // pred_check_branch
          %219 = sbr.rel (%p217) target = $region24
        $region23: #{tpu_custom_call.1} parent=11 // pred_region
          _
        $region24: #{tpu_custom_call.1} parent=11 // pred_fallthru
          _
        // Predicated region
        $region25: #{tpu_custom_call.1} parent=11 // pred_check
          %p220 = pneg %p140
        $region26: #{tpu_custom_call.1} parent=11 // pred_check_branch
          %222 = sbr.rel (%p220) target = $region28
        $region27: #{tpu_custom_call.1} parent=11 // pred_region
          _
        $region28: #{tpu_custom_call.1} parent=11 // pred_fallthru
          _
      $region12: #{tpu_custom_call.1} parent=5 // pred_fallthru
        _
      %p223 = scmp.lt.s32.totalorder %s16, 2
      // Predicated region
      $region29: #{tpu_custom_call.1} parent=5 // pred_check
        %p224 = pneg %p223
      $region30: #{tpu_custom_call.1} parent=5 // pred_check_branch
        %226 = sbr.rel (%p224) target = $region32
      $region31: #{tpu_custom_call.1} parent=5 // pred_region
        // Predicated region
        $region33: #{tpu_custom_call.1} parent=31 // pred_check
          %p227 = pneg %p50
        $region34: #{tpu_custom_call.1} parent=31 // pred_check_branch
          %229 = sbr.rel (%p227) target = $region36
        $region35: #{tpu_custom_call.1} parent=31 // pred_region
          %s230 = sand.u32 %s40, 1
          %s231 = scalar_lea.sflag [#allocation3], %s230
          %s232 = sand.u32 %s40, 1
          %s233 = smul.addr %s232, 128
          %s234 = scalar_lea.vmem [#allocation2], %s233
          %s235 = smul.u32 2, %s24
          %237 = vsyncadd %s231, 0
          %s238 = smul.addr %s23, 16
          %s239 = sadd.s32 %s235, %s238
          %s240 = smul.addr %s239, 8
          %s241 = scalar_lea.hbm %s0, %s240
          %s242 = sshll.u32 %s241, 4
          %s243 = int_to_ptr.hbm [resolvable:$true] %s242
          %s244 = sshll.u32 %s234, 4
          %s245 = int_to_ptr.vmem [resolvable:$true] %s244
          %250 = dma.hbm_to_vmem [thread:$0]  %s243, 2048, %s245, %s231, 256, 256, 16
        $region36: #{tpu_custom_call.1} parent=31 // pred_fallthru
          _
      $region32: #{tpu_custom_call.1} parent=5 // pred_fallthru
        _
      %p251 = scmp.le.s32.totalorder 1, %s16
      %p252 = scmp.lt.s32.totalorder %s16, 3
      %p253 = pnand %p251, %p252
      %p254 = pneg %p253
      // Predicated region
      $region37: #{tpu_custom_call.1} parent=5 // pred_check
        _
      $region38: #{tpu_custom_call.1} parent=5 // pred_check_branch
        %256 = sbr.rel (%p253) target = $region40
      $region39: #{tpu_custom_call.1} parent=5 // pred_region
        %s257 = ssub.s32 %s16, 1
        %s258 = sand.u32 %s43, 1
        %s259 = scalar_lea.sflag [#allocation3], %s258
        %s260 = sand.u32 %s43, 1
        %s261 = smul.addr %s260, 128
        %s262 = scalar_lea.vmem [#allocation2], %s261
        // Predicated region
        $region41: #{tpu_custom_call.1} parent=39 // pred_check
          %p263 = pneg %p56
        $region42: #{tpu_custom_call.1} parent=39 // pred_check_branch
          %265 = sbr.rel (%p263) target = $region44
        $region43: #{tpu_custom_call.1} parent=39 // pred_region
          %267 = dma.done %s259, 2048
        $region44: #{tpu_custom_call.1} parent=39 // pred_fallthru
          _
        %s268 = sand.u32 %s43, 1
        %s269 = scalar_lea.sflag [#allocation3], %s268
        %s270 = sand.u32 %s43, 1
        %s271 = smul.addr %s270, 128
        %s272 = scalar_lea.vmem [#allocation2], %s271
        %p273 = pneg %p56
        %p274 = pneg %p53
        %p275 = pneg %p77
        %p276 = pneg %p74
        %p277 = pneg %p98
        %p278 = pneg %p95
        %p279 = pneg %p119
        %p280 = pneg %p116
        %p281 = pneg %p140
        %p282 = pneg %p137
        %p283 = pneg %p168
        %p284 = pneg %p165
        %s285 = smul.u32 2, %s26
        %p286 = scmp.lt.s32.totalorder %s25, 1
        %s287 = scalar_select %p286, %s25, 1
        %p288 = scmp.lt.s32.totalorder %s285, 1
        %s289 = scalar_select %p288, %s285, 1
        %s290 = smul.addr %s287, 2
        %s291 = sadd.s32 %s289, %s290
        %s292 = smul.addr %s291, 4
        %s293 = scalar_lea.vmem %s5, %s292
        %p294 = pneg %p196
        %p295 = pneg %p193
        %s296 = smul.u32 2, %s26
        %p297 = scmp.lt.s32.totalorder %s25, 1
        %s298 = scalar_select %p297, %s25, 1
        %p299 = scmp.lt.s32.totalorder %s296, 1
        %s300 = scalar_select %p299, %s296, 1
        %s301 = smul.addr %s298, 2
        %s302 = sadd.s32 %s300, %s301
        %s303 = smul.addr %s302, 4
        %s304 = scalar_lea.vmem %s6, %s303
        %s305 = smul.u32 2, %s26
        %s306 = smul.u32 2, %s26
        %p307 = scmp.lt.s32.totalorder %s25, 1
        %s308 = scalar_select %p307, %s25, 1
        %p309 = scmp.lt.s32.totalorder %s306, 1
        %s310 = scalar_select %p309, %s306, 1
        %s311 = smul.addr %s308, 2
        %s312 = sadd.s32 %s310, %s311
        %s313 = smul.addr %s312, 4
        %s314 = scalar_lea.vmem %s5, %s313
        %s315 = smul.u32 2, %s26
        %s316 = smul.u32 2, %s26
        %p317 = scmp.lt.s32.totalorder %s25, 1
        %s318 = scalar_select %p317, %s25, 1
        %p319 = scmp.lt.s32.totalorder %s316, 1
        %s320 = scalar_select %p319, %s316, 1
        %s321 = smul.addr %s318, 2
        %s322 = sadd.s32 %s320, %s321
        %s323 = smul.addr %s322, 4
        %s324 = scalar_lea.vmem %s6, %s323
        %s325 = smul.u32 2, %s26
        %v326 = vld [vmem:[%s262] sm:$0xff]
        %v327 = vld [vmem:[%s262 + $0x8] sm:$0xff]
        %v328 = vld [vmem:[%s262 + $0x10] sm:$0xff]
        %v329 = vld [vmem:[%s262 + $0x18] sm:$0xff]
        %v330 = vld [vmem:[%s262 + $0x20] sm:$0xff]
        %v331 = vld [vmem:[%s262 + $0x28] sm:$0xff]
        %v332 = vld [vmem:[%s262 + $0x30] sm:$0xff]
        %v333 = vld [vmem:[%s262 + $0x38] sm:$0xff]
        %v334 = vld [vmem:[%s262 + $0x40] sm:$0xff]
        %v335 = vld [vmem:[%s262 + $0x48] sm:$0xff]
        %v336 = vld [vmem:[%s262 + $0x50] sm:$0xff]
        %v337 = vld [vmem:[%s262 + $0x58] sm:$0xff]
        %v338 = vld [vmem:[%s262 + $0x60] sm:$0xff]
        %v339 = vld [vmem:[%s262 + $0x68] sm:$0xff]
        %v340 = vld [vmem:[%s262 + $0x70] sm:$0xff]
        %v341 = vld [vmem:[%s262 + $0x78] sm:$0xff]
        %v342 = vld [vmem:[%s1] sm:$0x7]
        %v343 = vld [vmem:[%s3] sm:$0x7]
        %345 = vset.pattern.permute.xlu0 0
        %346 = vperm.xlu0 %345, %v343
        %v347 = vpop.permute.xlu0 %346
        %vm349 = vcmask 523264
        %v351 = vsel %vm349, %v342, 0
        %353 = vmatpush.msra.mxu0 0.0
        %354 = vmatpush.msra.mxu0 0.0
        %355 = vmatpush.msra.mxu0 0.0
        %356 = vmatpush.msra.mxu0 0.0
        %357 = vmatpush.msra.mxu0 0.0
        %358 = vmatpush.msra.mxu0 0.0
        %359 = vmatpush.msra.mxu0 0.0
        %360 = vmatpush.msra.mxu0 0.0
        %361 = vmatpush.msra.mxu0 %v340
        %362 = vmatpush.msra.mxu0 %v338
        %363 = vmatpush.msra.mxu0 %v336
        %364 = vmatpush.msra.mxu0 %v334
        %365 = vmatpush.msra.mxu0 %v332
        %366 = vmatpush.msra.mxu0 %v330
        %367 = vmatpush.msra.mxu0 %v328
        %368 = vmatpush.msra.mxu0 %v326
        %369 = vmatmul.f32.gmra.mxu0 %v351
        %v370 = vpop.f32.mrf.mxu0
        %v371 = vadd.f32 %v347, %v370
        %372 = vdwg.mxu0
        %373 = vmatpush.msra.mxu0 0.0
        %374 = vmatpush.msra.mxu0 0.0
        %375 = vmatpush.msra.mxu0 0.0
        %376 = vmatpush.msra.mxu0 0.0
        %377 = vmatpush.msra.mxu0 0.0
        %378 = vmatpush.msra.mxu0 0.0
        %379 = vmatpush.msra.mxu0 0.0
        %380 = vmatpush.msra.mxu0 0.0
        %381 = vmatpush.msra.mxu0 %v341
        %382 = vmatpush.msra.mxu0 %v339
        %383 = vmatpush.msra.mxu0 %v337
        %384 = vmatpush.msra.mxu0 %v335
        %385 = vmatpush.msra.mxu0 %v333
        %386 = vmatpush.msra.mxu0 %v331
        %387 = vmatpush.msra.mxu0 %v329
        %388 = vmatpush.msra.mxu0 %v327
        %389 = vmatmul.f32.gmra.mxu0 %v351
        %v390 = vpop.f32.mrf.mxu0
        %v391 = vadd.f32 %v347, %v390
        %392 = vdwg.mxu0
        %v393 = vld [vmem:[%s2] sm:$0x7]
        %v394 = vld [vmem:[%s4] sm:$0x7]
        %396 = vset.pattern.permute.xlu0 0
        %397 = vperm.xlu0 %396, %v394
        %v398 = vpop.permute.xlu0 %397
        %v401 = vsel %vm349, %v393, 0
        %403 = vmatpush.msra.mxu0 0.0
        %404 = vmatpush.msra.mxu0 0.0
        %405 = vmatpush.msra.mxu0 0.0
        %406 = vmatpush.msra.mxu0 0.0
        %407 = vmatpush.msra.mxu0 0.0
        %408 = vmatpush.msra.mxu0 0.0
        %409 = vmatpush.msra.mxu0 0.0
        %410 = vmatpush.msra.mxu0 0.0
        %411 = vmatpush.msra.mxu0 %v340
        %412 = vmatpush.msra.mxu0 %v338
        %413 = vmatpush.msra.mxu0 %v336
        %414 = vmatpush.msra.mxu0 %v334
        %415 = vmatpush.msra.mxu0 %v332
        %416 = vmatpush.msra.mxu0 %v330
        %417 = vmatpush.msra.mxu0 %v328
        %418 = vmatpush.msra.mxu0 %v326
        %419 = vmatmul.f32.gmra.mxu0 %v401
        %v420 = vpop.f32.mrf.mxu0
        %v421 = vadd.f32 %v398, %v420
        %422 = vdwg.mxu0
        %423 = vmatpush.msra.mxu0 0.0
        %424 = vmatpush.msra.mxu0 0.0
        %425 = vmatpush.msra.mxu0 0.0
        %426 = vmatpush.msra.mxu0 0.0
        %427 = vmatpush.msra.mxu0 0.0
        %428 = vmatpush.msra.mxu0 0.0
        %429 = vmatpush.msra.mxu0 0.0
        %430 = vmatpush.msra.mxu0 0.0
        %431 = vmatpush.msra.mxu0 %v341
        %432 = vmatpush.msra.mxu0 %v339
        %433 = vmatpush.msra.mxu0 %v337
        %434 = vmatpush.msra.mxu0 %v335
        %435 = vmatpush.msra.mxu0 %v333
        %436 = vmatpush.msra.mxu0 %v331
        %437 = vmatpush.msra.mxu0 %v329
        %438 = vmatpush.msra.mxu0 %v327
        %439 = vmatmul.f32.gmra.mxu0 %v401
        %v440 = vpop.f32.mrf.mxu0
        %v441 = vadd.f32 %v398, %v440
        %442 = vdwg.mxu0
        %v443 = vmax.f32 %v371, %v421
        %v444 = vmax.f32 %v391, %v441
        %v445 = vsub.f32 %v371, %v443
        %v446 = vsub.f32 %v391, %v444
        %v447 = vmul.f32 %v445, 1.442695
        %v448 = vpow.pop %v447
        %v449 = vmul.f32 %v446, 1.442695
        %v450 = vpow.pop %v449
        %v451 = vsub.f32 %v421, %v443
        %v452 = vsub.f32 %v441, %v444
        %v453 = vmul.f32 %v451, 1.442695
        %v454 = vpow.pop %v453
        %v455 = vmul.f32 %v452, 1.442695
        %v456 = vpow.pop %v455
        %v457 = vadd.f32 %v448, %v454
        %v458 = vadd.f32 %v450, %v456
        %v459 = vlog2.pop %v457
        %v460 = vmul.f32 %v459, 0.6931472
        %v461 = vlog2.pop %v458
        %v462 = vmul.f32 %v461, 0.6931472
        %v463 = vadd.f32 %v443, %v460
        %v464 = vadd.f32 %v444, %v462
        %v465 = vsub.f32 %v371, %v463
        %v466 = vsub.f32 %v391, %v464
        %v469 = vrot.slane %v466, 4
        %vm470 = vcmask 1043456
        %v471 = vsel %vm470, %v465, %v469
        %473 = vst [vmem:[%s314] sm:$0x77] %v471
        %v474 = vsub.f32 %v421, %v463
        %v475 = vsub.f32 %v441, %v464
        %v478 = vrot.slane %v475, 4
        %v479 = vsel %vm470, %v474, %v478
        %481 = vst [vmem:[%s324] sm:$0x77] %v479
        %s482 = smul.u32 2, %s26
        %p483 = scmp.lt.s32.totalorder %s25, 1
        %s484 = scalar_select %p483, %s25, 1
        %p485 = scmp.lt.s32.totalorder %s482, 1
        %s486 = scalar_select %p485, %s482, 1
        %s487 = smul.addr %s484, 2
        %s488 = sadd.s32 %s486, %s487
        %s489 = smul.addr %s488, 4
        %s490 = scalar_lea.vmem %s5, %s489
        %s491 = smul.u32 2, %s26
        %p492 = scmp.lt.s32.totalorder %s25, 1
        %s493 = scalar_select %p492, %s25, 1
        %p494 = scmp.lt.s32.totalorder %s491, 1
        %s495 = scalar_select %p494, %s491, 1
        %s496 = smul.addr %s493, 2
        %s497 = sadd.s32 %s495, %s496
        %s498 = smul.addr %s497, 4
        %s499 = scalar_lea.vmem %s6, %s498
        // Predicated region
        $region45: #{tpu_custom_call.1} parent=39 // pred_check
          %p500 = pneg %p165
        $region46: #{tpu_custom_call.1} parent=39 // pred_check_branch
          %502 = sbr.rel (%p500) target = $region48
        $region47: #{tpu_custom_call.1} parent=39 // pred_region
          %s503 = smul.u32 2, %s26
        $region48: #{tpu_custom_call.1} parent=39 // pred_fallthru
          _
        // Predicated region
        $region49: #{tpu_custom_call.1} parent=39 // pred_check
          %p504 = pneg %p193
        $region50: #{tpu_custom_call.1} parent=39 // pred_check_branch
          %506 = sbr.rel (%p504) target = $region52
        $region51: #{tpu_custom_call.1} parent=39 // pred_region
          %s507 = smul.u32 2, %s26
        $region52: #{tpu_custom_call.1} parent=39 // pred_fallthru
          _
      $region40: #{tpu_custom_call.1} parent=5 // pred_fallthru
        _
      %p508 = scmp.le.s32.totalorder 2, %s16
      // Predicated region
      $region53: #{tpu_custom_call.1} parent=5 // pred_check
        %p509 = pneg %p508
      $region54: #{tpu_custom_call.1} parent=5 // pred_check_branch
        %511 = sbr.rel (%p509) target = $region56
      $region55: #{tpu_custom_call.1} parent=5 // pred_region
        %s512 = ssub.s32 %s16, 2
        // Predicated region
        $region57: #{tpu_custom_call.1} parent=55 // pred_check
          %p513 = pneg %p171
        $region58: #{tpu_custom_call.1} parent=55 // pred_check_branch
          %515 = sbr.rel (%p513) target = $region60
        $region59: #{tpu_custom_call.1} parent=55 // pred_region
          %s516 = smul.u32 2, %s28
          %p517 = scmp.lt.s32.totalorder %s27, 1
          %s518 = scalar_select %p517, %s27, 1
          %p519 = scmp.lt.s32.totalorder %s516, 1
          %s520 = scalar_select %p519, %s516, 1
          %s521 = smul.addr %s518, 2
          %s522 = sadd.s32 %s520, %s521
          %s523 = smul.addr %s522, 4
          %s524 = scalar_lea.vmem %s5, %s523
        $region60: #{tpu_custom_call.1} parent=55 // pred_fallthru
          _
        // Predicated region
        $region61: #{tpu_custom_call.1} parent=55 // pred_check
          %p525 = pneg %p199
        $region62: #{tpu_custom_call.1} parent=55 // pred_check_branch
          %527 = sbr.rel (%p525) target = $region64
        $region63: #{tpu_custom_call.1} parent=55 // pred_region
          %s528 = smul.u32 2, %s28
          %p529 = scmp.lt.s32.totalorder %s27, 1
          %s530 = scalar_select %p529, %s27, 1
          %p531 = scmp.lt.s32.totalorder %s528, 1
          %s532 = scalar_select %p531, %s528, 1
          %s533 = smul.addr %s530, 2
          %s534 = sadd.s32 %s532, %s533
          %s535 = smul.addr %s534, 4
          %s536 = scalar_lea.vmem %s6, %s535
        $region64: #{tpu_custom_call.1} parent=55 // pred_fallthru
          _
      $region56: #{tpu_custom_call.1} parent=5 // pred_fallthru
        _
    $region6: #{tpu_custom_call.1} parent=1 // loop_footer
      %s20 = sadd.s32 1, %s16
    $region7: #{tpu_custom_call.1} parent=1 // loop_footer_branch
      %15 = sbr.rel target = $region3
    $region8: #{tpu_custom_call.1} parent=1 // loop_exit
      _
    %537 = vsyncpa [#allocation3], 1
    %s538 = scalar_lea.sflag [#allocation3], 1
    %539 = vsyncpa %s538, 1

</llo_original>
